<compile_context>
chip_gen: v7x
topology: tpu7x:2x2x1
jax: 0.10.0
libtpu: 0.0.40
codegen_flags: <defaults>
</compile_context>

<pallas_src>
import functools

import jax
import jax.numpy as jnp
from jax import lax
from jax.experimental import pallas as pl
from jax.experimental.pallas import tpu as pltpu


_NEG_BIG = -1e30  # finite "-inf" stand-in (keeps padded rows NaN-free)


def _round_up(x: int, m: int) -> int:
    return ((x + m - 1) // m) * m


def _instance_loss_kernel(zq_ref, zk_ref, loss_ref, m_ref, l_ref, pos_ref, *,
                          batch_size, n_valid):
    i = pl.program_id(0)            # row (query) tile   -- "parallel"
    j = pl.program_id(1)            # column (key) tile  -- reduction, innermost
    nj = pl.num_programs(1)

    T = zq_ref.shape[0]             # row tile == column tile size (static)
    n_pad = zk_ref.shape[0]         # padded N (static)

    @pl.when(j == 0)
    def _init():
        m_ref[...] = jnp.full_like(m_ref, _NEG_BIG)
        l_ref[...] = jnp.zeros_like(l_ref)
        pos_ref[...] = jnp.zeros_like(pos_ref)

    row0 = i * T
    col0 = pl.multiple_of(j * T, T)
    zk = zk_ref[pl.ds(col0, T), :]          # column tile from the resident key

    # (T, T) similarity tile; fp32 MXU accumulation. 1/temperature is already
    # folded into the query rows.
    s = lax.dot_general(
        zq_ref[...], zk,
        dimension_numbers=(((1,), (1,)), ((), ())),
        preferred_element_type=jnp.float32,
    )

    # ---- online logsumexp over column tiles (flash style) ------------------
    def lse_update(s_vals):
        m_old = m_ref[...]
        m_new = jnp.maximum(m_old, jnp.max(s_vals, axis=1, keepdims=True))
        l_ref[...] = (jnp.exp(m_old - m_new) * l_ref[...]
                      + jnp.sum(jnp.exp(s_vals - m_new), axis=1, keepdims=True))
        m_ref[...] = m_new

    has_col_pad = n_pad > n_valid            # static python bool
    needs_mask = i == j                      # the diagonal lives in this tile
    if has_col_pad:
        needs_mask = needs_mask | (j == nj - 1)

    @pl.when(needs_mask)
    def _masked_update():
        r = row0 + lax.broadcasted_iota(jnp.int32, (T, T), 0)
        c = col0 + lax.broadcasted_iota(jnp.int32, (T, T), 1)
        keep = r != c
        if has_col_pad:
            keep = keep & (c < n_valid)
        lse_update(jnp.where(keep, s, _NEG_BIG))

    @pl.when(jnp.logical_not(needs_mask))
    def _plain_update():
        lse_update(s)                        # interior tile: no mask work at all

    # ---- positive logit: sim[r, r+B] (r < B) / sim[r, r-B] (r >= B) --------
    # Only <= 2 column tiles per row tile can contain a positive column; gate
    # the (T, T) compare/select work behind a scalar predicate.
    col_hi = col0 + T
    a_lo = row0 + batch_size                               # rows r <  B
    a_hi = jnp.minimum(row0 + T, batch_size) + batch_size
    has_a = (a_lo < a_hi) & (a_lo < col_hi) & (col0 < a_hi)
    b_lo = jnp.maximum(row0, batch_size) - batch_size      # rows r >= B
    b_hi = jnp.minimum(row0 + T, 2 * batch_size) - batch_size
    has_b = (b_lo < b_hi) & (b_lo < col_hi) & (col0 < b_hi)

    @pl.when(has_a | has_b)
    def _positives():
        r = row0 + lax.broadcasted_iota(jnp.int32, (T, T), 0)
        c = col0 + lax.broadcasted_iota(jnp.int32, (T, T), 1)
        pair = jnp.where(r < batch_size, r + batch_size, r - batch_size)
        pos_ref[...] += jnp.sum(jnp.where(c == pair, s, 0.0),
                                axis=1, keepdims=True)

    @pl.when(j == nj - 1)
    def _finalize():
        lse = m_ref[...] + jnp.log(l_ref[...])             # (T, 1)
        per_row = lse - pos_ref[...]
        if n_pad > n_valid:                                # zero padded rows
            row = row0 + lax.broadcasted_iota(jnp.int32, (T, 1), 0)
            per_row = jnp.where(row < n_valid, per_row, 0.0)
        loss_ref[...] = per_row.astype(loss_ref.dtype)


def instance_loss(z_i: jax.Array, z_j: jax.Array, batch_size: int,
                  temperature: float, *, tile: int = 512,
                  matmul_dtype=jnp.bfloat16) -> jax.Array:
    """Pallas implementation of InstanceLoss.forward(z_i, z_j)."""
    assert z_i.shape == z_j.shape and z_i.ndim == 2, "expected (B, D) inputs"
    B, D = z_i.shape
    assert B == batch_size
    N = 2 * B
    inv_temp = 1.0 / float(temperature)

    z = jnp.concatenate([z_i, z_j], axis=0).astype(jnp.float32)   # (N, D)
    # Fold 1/temperature into the query side ((N,D) work, not (T,T) per step),
    # then cast both MXU operands (fp32 accumulation stays in the kernel).
    zq = (z * inv_temp).astype(matmul_dtype)
    zk = z.astype(matmul_dtype)

    # Tile: sublane-aligned, as large as `tile`, but small enough that the
    # "parallel" row axis has >= 2 tiles whenever N allows (v7x has 2 TCs).
    mult = 8 if jnp.dtype(matmul_dtype) == jnp.dtype(jnp.float32) else 16
    T = min(tile, _round_up(max((N + 1) // 2, 1), mult))
    N_pad = _round_up(N, T)
    if N_pad != N:
        pad = ((0, N_pad - N), (0, 0))
        zq = jnp.pad(zq, pad)
        zk = jnp.pad(zk, pad)

    grid = (N_pad // T, N_pad // T)
    kernel = functools.partial(_instance_loss_kernel,
                               batch_size=batch_size, n_valid=N)

    # VMEM sizing: resident key (x2 pipeline buffers) + double-buffered query
    # tile + fp32 (T,T) intermediates; keep well under v7x's 64 MiB per core.
    itemsize = jnp.dtype(matmul_dtype).itemsize
    vmem_est = (2 * N_pad * D * itemsize + 4 * T * D * itemsize
                + 8 * T * T * 4 + 16 * T * 4)
    vmem_limit = int(max(vmem_est + (8 << 20), 32 << 20))
    # TODO(synk): for very large N (resident key > ~24 MiB) fall back to a
    # streamed-key-tile variant on v7x (only 64 MiB VMEM per TensorCore).

    per_row = pl.pallas_call(
        kernel,
        out_shape=jax.ShapeDtypeStruct((N_pad, 1), jnp.float32),
        grid_spec=pltpu.PrefetchScalarGridSpec(
            num_scalar_prefetch=0,
            grid=grid,
            in_specs=[
                # query row tile: re-fetched only when i changes
                pl.BlockSpec((T, D), lambda i, j: (i, 0)),
                # key matrix: constant block index -> DMA'd from HBM once
                pl.BlockSpec((N_pad, D), lambda i, j: (0, 0)),
            ],
            out_specs=pl.BlockSpec((T, 1), lambda i, j: (i, 0)),
            scratch_shapes=[
                pltpu.VMEM((T, 1), jnp.float32),   # running max  m
                pltpu.VMEM((T, 1), jnp.float32),   # running sum  l
                pltpu.VMEM((T, 1), jnp.float32),   # positive logit
            ],
        ),
        compiler_params=pltpu.CompilerParams(
            dimension_semantics=("parallel", "arbitrary"),
            vmem_limit_bytes=vmem_limit,
        ),
    )(zq, zk)

    # CrossEntropyLoss(reduction='sum') / N ; padded rows contribute 0.
    return jnp.sum(per_row) / N


if __name__ == "__main__":
    key = jax.random.PRNGKey(0)
    k1, k2 = jax.random.split(key)

    batch_size, D = 8, 32
    temperature = 0.5
    z_i = jax.random.normal(k1, (batch_size, D), dtype=jnp.float32)
    z_j = jax.random.normal(k2, (batch_size, D), dtype=jnp.float32)

    # Reference faithful to the PyTorch module (mask + gathered negatives).
    N = 2 * batch_size
    z = jnp.concatenate([z_i, z_j], axis=0)
    sim = (z @ z.T) / temperature
    pos = jnp.concatenate([jnp.diagonal(sim, offset=batch_size),
                           jnp.diagonal(sim, offset=-batch_size)]).reshape(N, 1)
    mask = ~jnp.eye(N, dtype=bool)
    idx = jnp.arange(batch_size)
    mask = mask.at[idx, idx + batch_size].set(False)
    mask = mask.at[idx + batch_size, idx].set(False)
    neg = sim[mask].reshape(N, N - 2)
    logits = jnp.concatenate([pos, neg], axis=1)
    lse = jax.scipy.special.logsumexp(logits, axis=1)
    ref = jnp.sum(lse - logits[:, 0]) / N

    # fp32-operand path: near-exact match (also exercises the 2x2 tile grid
    # and the gated diagonal / positive branches).
    loss_f32 = instance_loss(z_i, z_j, batch_size, temperature,
                             matmul_dtype=jnp.float32)
    jax.block_until_ready(loss_f32)
    assert loss_f32.shape == ()
    assert jnp.allclose(loss_f32, ref, atol=1e-4, rtol=1e-4), (loss_f32, ref)

    # Default bf16 MXU-operand path: fp32 accumulation, bf16-level tolerance.
    loss_bf16 = instance_loss(z_i, z_j, batch_size, temperature)
    jax.block_until_ready(loss_bf16)
    assert loss_bf16.shape == ()
    assert jnp.allclose(loss_bf16, ref, atol=2e-1, rtol=2e-2), (loss_bf16, ref)

    print("KERNEL_OK")
</pallas_src>

<mosaic_0001>
module attributes {stable_mosaic.version = 11 : i64} {
  func.func @_instance_loss_kernel(%arg0: i32, %arg1: i32, %arg2: memref<8x32xf32, #tpu.memory_space<vmem>>, %arg3: memref<16x32xf32, #tpu.memory_space<vmem>>, %arg4: memref<8x1xf32, #tpu.memory_space<vmem>>, %arg5: memref<8x1xf32, #tpu.memory_space<vmem>>, %arg6: memref<8x1xf32, #tpu.memory_space<vmem>>, %arg7: memref<8x1xf32, #tpu.memory_space<vmem>>) attributes {dimension_semantics = [#tpu.dimension_semantics<parallel>, #tpu.dimension_semantics<arbitrary>], iteration_bounds = array<i64: 2, 2>, scalar_prefetch = 0 : i64, scratch_operands = 3 : i64, tpu.core_type = #tpu.core_type<tc>, window_params = [{transform_indices = @transform_0, window_bounds = array<i64: 8, 32>}, {pipeline_mode = #tpu.pipeline_mode<synchronous>, transform_indices = @transform_1, window_bounds = array<i64: 16, 32>}, {transform_indices = @transform_2, window_bounds = array<i64: 8, 1>}]} {
    %c0_i32 = arith.constant 0 : i32
    %0 = arith.cmpi eq, %arg1, %c0_i32 : i32
    %1 = arith.extui %0 : i1 to i32
    %c0_i32_0 = arith.constant 0 : i32
    %2 = arith.cmpi ne, %1, %c0_i32_0 : i32
    scf.if %2 {
      %cst_17 = arith.constant -1.000000e+30 : f32
      %42 = vector.broadcast %cst_17 : f32 to vector<8x1xf32>
      %c0_18 = arith.constant 0 : index
      %c0_19 = arith.constant 0 : index
      %43 = vector.load %arg5[%c0_18, %c0_19] : memref<8x1xf32, #tpu.memory_space<vmem>>, vector<8x1xf32>
      tpu.vector_store %arg5[%c0_18, %c0_19], %42 {strides = array<i32>} : memref<8x1xf32, #tpu.memory_space<vmem>>, vector<8x1xf32>,
      %cst_20 = arith.constant 0.000000e+00 : f32
      %44 = vector.broadcast %cst_20 : f32 to vector<8x1xf32>
      %c0_21 = arith.constant 0 : index
      %c0_22 = arith.constant 0 : index
      %45 = vector.load %arg6[%c0_21, %c0_22] : memref<8x1xf32, #tpu.memory_space<vmem>>, vector<8x1xf32>
      tpu.vector_store %arg6[%c0_21, %c0_22], %44 {strides = array<i32>} : memref<8x1xf32, #tpu.memory_space<vmem>>, vector<8x1xf32>,
      %cst_23 = arith.constant 0.000000e+00 : f32
      %46 = vector.broadcast %cst_23 : f32 to vector<8x1xf32>
      %c0_24 = arith.constant 0 : index
      %c0_25 = arith.constant 0 : index
      %47 = vector.load %arg7[%c0_24, %c0_25] : memref<8x1xf32, #tpu.memory_space<vmem>>, vector<8x1xf32>
      tpu.vector_store %arg7[%c0_24, %c0_25], %46 {strides = array<i32>} : memref<8x1xf32, #tpu.memory_space<vmem>>, vector<8x1xf32>,
    } else {
    }
    %c8_i32 = arith.constant 8 : i32
    %3 = arith.muli %arg0, %c8_i32 : i32
    %c8_i32_1 = arith.constant 8 : i32
    %4 = arith.muli %arg1, %c8_i32_1 : i32
    %5 = tpu.assume_multiple %4, 8 : i32
    %6 = arith.index_cast %5 : i32 to index
    %c0 = arith.constant 0 : index
    %7 = vector.load %arg3[%6, %c0] : memref<16x32xf32, #tpu.memory_space<vmem>>, vector<8x32xf32>
    %c0_2 = arith.constant 0 : index
    %c0_3 = arith.constant 0 : index
    %8 = vector.load %arg2[%c0_2, %c0_3] : memref<8x32xf32, #tpu.memory_space<vmem>>, vector<8x32xf32>
    %cst = arith.constant dense<0.000000e+00> : vector<8x8xf32>
    %9 = tpu.matmul %8, %7, %cst {dimension_numbers = #tpu.dot_dimension_numbers<[1], [1], [0], [0], [0, 0, 1, 0], [], []>} : vector<8x32xf32>, vector<8x32xf32>, vector<8x8xf32> -> vector<8x8xf32>
    %10 = arith.cmpi eq, %arg0, %arg1 : i32
    %11 = arith.extui %10 : i1 to i32
    %c0_i32_4 = arith.constant 0 : i32
    %12 = arith.cmpi ne, %11, %c0_i32_4 : i32
    scf.if %12 {
      %42 = tpu.iota {dimensions = array<i32: 0>} : vector<8x8xi32>
      %43 = vector.broadcast %3 : i32 to vector<8x8xi32>
      %44 = arith.addi %43, %42 : vector<8x8xi32>
      %45 = tpu.iota {dimensions = array<i32: 1>} : vector<8x8xi32>
      %46 = vector.broadcast %5 : i32 to vector<8x8xi32>
      %47 = arith.addi %46, %45 : vector<8x8xi32>
      %48 = arith.cmpi ne, %44, %47 : vector<8x8xi32>
      %cst_17 = arith.constant -1.000000e+30 : f32
      %49 = vector.broadcast %cst_17 : f32 to vector<8x8xf32>
      %50 = arith.select %48, %9, %49 : vector<8x8xi1>, vector<8x8xf32>
      %c0_18 = arith.constant 0 : index
      %c0_19 = arith.constant 0 : index
      %51 = vector.load %arg5[%c0_18, %c0_19] : memref<8x1xf32, #tpu.memory_space<vmem>>, vector<8x1xf32>
      %cst_20 = arith.constant dense<0xFF800000> : vector<8xf32>
      %52 = vector.multi_reduction <maximumf>, %50, %cst_20 [1] : vector<8x8xf32> to vector<8xf32>
      %53 = vector.shape_cast %52 : vector<8xf32> to vector<8x1xf32>
      %54 = arith.maximumf %51, %53 : vector<8x1xf32>
      %55 = arith.subf %51, %54 : vector<8x1xf32>
      %56 = math.exp %55 : vector<8x1xf32>
      %c0_21 = arith.constant 0 : index
      %c0_22 = arith.constant 0 : index
      %57 = vector.load %arg6[%c0_21, %c0_22] : memref<8x1xf32, #tpu.memory_space<vmem>>, vector<8x1xf32>
      %58 = arith.mulf %56, %57 : vector<8x1xf32>
      %59 = vector.broadcast %54 : vector<8x1xf32> to vector<8x8xf32>
      %60 = arith.subf %50, %59 : vector<8x8xf32>
      %61 = math.exp %60 : vector<8x8xf32>
      %cst_23 = arith.constant dense<0.000000e+00> : vector<8xf32>
      %62 = vector.multi_reduction <add>, %61, %cst_23 [1] : vector<8x8xf32> to vector<8xf32>
      %63 = vector.shape_cast %62 : vector<8xf32> to vector<8x1xf32>
      %64 = arith.addf %58, %63 : vector<8x1xf32>
      %c0_24 = arith.constant 0 : index
      %c0_25 = arith.constant 0 : index
      %65 = vector.load %arg6[%c0_24, %c0_25] : memref<8x1xf32, #tpu.memory_space<vmem>>, vector<8x1xf32>
      tpu.vector_store %arg6[%c0_24, %c0_25], %64 {strides = array<i32>} : memref<8x1xf32, #tpu.memory_space<vmem>>, vector<8x1xf32>,
      %c0_26 = arith.constant 0 : index
      %c0_27 = arith.constant 0 : index
      %66 = vector.load %arg5[%c0_26, %c0_27] : memref<8x1xf32, #tpu.memory_space<vmem>>, vector<8x1xf32>
      tpu.vector_store %arg5[%c0_26, %c0_27], %54 {strides = array<i32>} : memref<8x1xf32, #tpu.memory_space<vmem>>, vector<8x1xf32>,
    } else {
    }
    %true = arith.constant true
    %13 = arith.xori %10, %true : i1
    %14 = arith.extui %13 : i1 to i32
    %c0_i32_5 = arith.constant 0 : i32
    %15 = arith.cmpi ne, %14, %c0_i32_5 : i32
    scf.if %15 {
      %c0_17 = arith.constant 0 : index
      %c0_18 = arith.constant 0 : index
      %42 = vector.load %arg5[%c0_17, %c0_18] : memref<8x1xf32, #tpu.memory_space<vmem>>, vector<8x1xf32>
      %cst_19 = arith.constant dense<0xFF800000> : vector<8xf32>
      %43 = vector.multi_reduction <maximumf>, %9, %cst_19 [1] : vector<8x8xf32> to vector<8xf32>
      %44 = vector.shape_cast %43 : vector<8xf32> to vector<8x1xf32>
      %45 = arith.maximumf %42, %44 : vector<8x1xf32>
      %46 = arith.subf %42, %45 : vector<8x1xf32>
      %47 = math.exp %46 : vector<8x1xf32>
      %c0_20 = arith.constant 0 : index
      %c0_21 = arith.constant 0 : index
      %48 = vector.load %arg6[%c0_20, %c0_21] : memref<8x1xf32, #tpu.memory_space<vmem>>, vector<8x1xf32>
      %49 = arith.mulf %47, %48 : vector<8x1xf32>
      %50 = vector.broadcast %45 : vector<8x1xf32> to vector<8x8xf32>
      %51 = arith.subf %9, %50 : vector<8x8xf32>
      %52 = math.exp %51 : vector<8x8xf32>
      %cst_22 = arith.constant dense<0.000000e+00> : vector<8xf32>
      %53 = vector.multi_reduction <add>, %52, %cst_22 [1] : vector<8x8xf32> to vector<8xf32>
      %54 = vector.shape_cast %53 : vector<8xf32> to vector<8x1xf32>
      %55 = arith.addf %49, %54 : vector<8x1xf32>
      %c0_23 = arith.constant 0 : index
      %c0_24 = arith.constant 0 : index
      %56 = vector.load %arg6[%c0_23, %c0_24] : memref<8x1xf32, #tpu.memory_space<vmem>>, vector<8x1xf32>
      tpu.vector_store %arg6[%c0_23, %c0_24], %55 {strides = array<i32>} : memref<8x1xf32, #tpu.memory_space<vmem>>, vector<8x1xf32>,
      %c0_25 = arith.constant 0 : index
      %c0_26 = arith.constant 0 : index
      %57 = vector.load %arg5[%c0_25, %c0_26] : memref<8x1xf32, #tpu.memory_space<vmem>>, vector<8x1xf32>
      tpu.vector_store %arg5[%c0_25, %c0_26], %45 {strides = array<i32>} : memref<8x1xf32, #tpu.memory_space<vmem>>, vector<8x1xf32>,
    } else {
    }
    %c8_i32_6 = arith.constant 8 : i32
    %16 = arith.addi %5, %c8_i32_6 : i32
    %c8_i32_7 = arith.constant 8 : i32
    %17 = arith.addi %3, %c8_i32_7 : i32
    %c8_i32_8 = arith.constant 8 : i32
    %18 = arith.addi %3, %c8_i32_8 : i32
    %c8_i32_9 = arith.constant 8 : i32
    %19 = arith.minsi %18, %c8_i32_9 : i32
    %c8_i32_10 = arith.constant 8 : i32
    %20 = arith.addi %19, %c8_i32_10 : i32
    %21 = arith.cmpi slt, %17, %20 : i32
    %22 = arith.cmpi slt, %17, %16 : i32
    %23 = arith.andi %21, %22 : i1
    %24 = arith.cmpi slt, %5, %20 : i32
    %25 = arith.andi %23, %24 : i1
    %c8_i32_11 = arith.constant 8 : i32
    %26 = arith.maxsi %3, %c8_i32_11 : i32
    %c8_i32_12 = arith.constant 8 : i32
    %27 = arith.subi %26, %c8_i32_12 : i32
    %c8_i32_13 = arith.constant 8 : i32
    %28 = arith.addi %3, %c8_i32_13 : i32
    %c16_i32 = arith.constant 16 : i32
    %29 = arith.minsi %28, %c16_i32 : i32
    %c8_i32_14 = arith.constant 8 : i32
    %30 = arith.subi %29, %c8_i32_14 : i32
    %31 = arith.cmpi slt, %27, %30 : i32
    %32 = arith.cmpi slt, %27, %16 : i32
    %33 = arith.andi %31, %32 : i1
    %34 = arith.cmpi slt, %5, %30 : i32
    %35 = arith.andi %33, %34 : i1
    %36 = arith.ori %25, %35 : i1
    %37 = arith.extui %36 : i1 to i32
    %c0_i32_15 = arith.constant 0 : i32
    %38 = arith.cmpi ne, %37, %c0_i32_15 : i32
    scf.if %38 {
      %42 = tpu.iota {dimensions = array<i32: 0>} : vector<8x8xi32>
      %43 = vector.broadcast %3 : i32 to vector<8x8xi32>
      %44 = arith.addi %43, %42 : vector<8x8xi32>
      %45 = tpu.iota {dimensions = array<i32: 1>} : vector<8x8xi32>
      %46 = vector.broadcast %5 : i32 to vector<8x8xi32>
      %47 = arith.addi %46, %45 : vector<8x8xi32>
      %c8_i32_17 = arith.constant 8 : i32
      %48 = vector.broadcast %c8_i32_17 : i32 to vector<8x8xi32>
      %49 = arith.cmpi slt, %44, %48 : vector<8x8xi32>
      %c8_i32_18 = arith.constant 8 : i32
      %50 = vector.broadcast %c8_i32_18 : i32 to vector<8x8xi32>
      %51 = arith.addi %44, %50 : vector<8x8xi32>
      %c8_i32_19 = arith.constant 8 : i32
      %52 = vector.broadcast %c8_i32_19 : i32 to vector<8x8xi32>
      %53 = arith.subi %44, %52 : vector<8x8xi32>
      %54 = arith.select %49, %51, %53 : vector<8x8xi1>, vector<8x8xi32>
      %c0_20 = arith.constant 0 : index
      %c0_21 = arith.constant 0 : index
      %55 = vector.load %arg7[%c0_20, %c0_21] : memref<8x1xf32, #tpu.memory_space<vmem>>, vector<8x1xf32>
      %56 = arith.cmpi eq, %47, %54 : vector<8x8xi32>
      %cst_22 = arith.constant 0.000000e+00 : f32
      %57 = vector.broadcast %cst_22 : f32 to vector<8x8xf32>
      %58 = arith.select %56, %9, %57 : vector<8x8xi1>, vector<8x8xf32>
      %cst_23 = arith.constant dense<0.000000e+00> : vector<8xf32>
      %59 = vector.multi_reduction <add>, %58, %cst_23 [1] : vector<8x8xf32> to vector<8xf32>
      %60 = vector.shape_cast %59 : vector<8xf32> to vector<8x1xf32>
      %61 = arith.addf %55, %60 : vector<8x1xf32>
      %c0_24 = arith.constant 0 : index
      %c0_25 = arith.constant 0 : index
      %62 = vector.load %arg7[%c0_24, %c0_25] : memref<8x1xf32, #tpu.memory_space<vmem>>, vector<8x1xf32>
      tpu.vector_store %arg7[%c0_24, %c0_25], %61 {strides = array<i32>} : memref<8x1xf32, #tpu.memory_space<vmem>>, vector<8x1xf32>,
    } else {
    }
    %c1_i32 = arith.constant 1 : i32
    %39 = arith.cmpi eq, %arg1, %c1_i32 : i32
    %40 = arith.extui %39 : i1 to i32
    %c0_i32_16 = arith.constant 0 : i32
    %41 = arith.cmpi ne, %40, %c0_i32_16 : i32
    scf.if %41 {
      %c0_17 = arith.constant 0 : index
      %c0_18 = arith.constant 0 : index
      %42 = vector.load %arg5[%c0_17, %c0_18] : memref<8x1xf32, #tpu.memory_space<vmem>>, vector<8x1xf32>
      %c0_19 = arith.constant 0 : index
      %c0_20 = arith.constant 0 : index
      %43 = vector.load %arg6[%c0_19, %c0_20] : memref<8x1xf32, #tpu.memory_space<vmem>>, vector<8x1xf32>
      %44 = math.log %43 : vector<8x1xf32>
      %45 = arith.addf %42, %44 : vector<8x1xf32>
      %c0_21 = arith.constant 0 : index
      %c0_22 = arith.constant 0 : index
      %46 = vector.load %arg7[%c0_21, %c0_22] : memref<8x1xf32, #tpu.memory_space<vmem>>, vector<8x1xf32>
      %47 = arith.subf %45, %46 : vector<8x1xf32>
      %c0_23 = arith.constant 0 : index
      %c0_24 = arith.constant 0 : index
      %48 = vector.load %arg4[%c0_23, %c0_24] : memref<8x1xf32, #tpu.memory_space<vmem>>, vector<8x1xf32>
      tpu.vector_store %arg4[%c0_23, %c0_24], %47 {strides = array<i32>} : memref<8x1xf32, #tpu.memory_space<vmem>>, vector<8x1xf32>,
    } else {
    }
    return
  }
  func.func @transform_0(%arg0: i32, %arg1: i32) -> (i32, i32) {
    %c0_i32 = arith.constant 0 : i32
    %c0_i32_0 = arith.constant 0 : i32
    return %arg0, %c0_i32 : i32, i32
  }
  func.func @transform_1(%arg0: i32, %arg1: i32) -> (i32, i32) {
    %c0_i32 = arith.constant 0 : i32
    %c0_i32_0 = arith.constant 0 : i32
    %c0_i32_1 = arith.constant 0 : i32
    return %c0_i32, %c0_i32_0 : i32, i32
  }
  func.func @transform_2(%arg0: i32, %arg1: i32) -> (i32, i32) {
    %c0_i32 = arith.constant 0 : i32
    %c0_i32_0 = arith.constant 0 : i32
    return %arg0, %c0_i32 : i32, i32
  }
}

</mosaic_0001>

<llo_original>
// kernel: tpu_custom_call.1
$region0: #{tpu_custom_call.1}
  #allocation0 [shape = 'u32[]', space=smem, size = 0x4, offset = 0x4, fixed_abs, tag = 'smem constant byte address 0x4 - core index']
  #allocation1 [shape = 'u32[144,128]{1,0:T(1,128)}', space=vmem, size = 0x12000, scoped, tag = 'internal scratch']
  #allocation2 [shape = 'f32[8,1]{1,0:T(8,128)}', space=vmem, size = 0x1000, scoped, tag = 'scratch operand']
  #allocation3 [shape = 'f32[8,1]{1,0:T(8,128)}', space=vmem, size = 0x1000, scoped, tag = 'scratch operand']
  #allocation4 [shape = 'f32[8,1]{1,0:T(8,128)}', space=vmem, size = 0x1000, scoped, tag = 'scratch operand']
  %s0 = inlined_call_operand.hbm [shape: f32[16,32], index: 0, kind: input, shape index: {}]
  %s1 = inlined_call_operand.hbm [shape: f32[16,32], index: 1, kind: input, shape index: {}]
  %s2 = inlined_call_operand.vmem [shape: f32[16,1], index: 2, kind: output, shape index: {}]
  %s3 = sld [smem:[#allocation0]]
  $region69: #{tpu_custom_call.1} parent=0
    _
  %s5 = ssub.s32 1, %s3
  %s6 = scalar_select 0, %s5, %s3
  $region1: #{tpu_custom_call.1} parent=0
    #allocation5 [shape = 'u8[8192]{0}', space=vmem, size = 0x2000, scoped, tag = 'input window, operand 0']
    #allocation6 [shape = 's32[2]{0}', space=sflag, size = 0x8, scoped, tag = 'scoped memory for tpu_custom_call.1']
    #allocation7 [shape = 'u8[8192]{0}', space=vmem, size = 0x2000, scoped, tag = 'input window, operand 1, single buffered']
    #allocation8 [shape = 's32[1]{0}', space=sflag, size = 0x4, scoped, tag = 'scoped memory for tpu_custom_call.1']
    %7 = vsyncpa [#allocation6], 0
    %s8 = scalar_lea.sflag [#allocation6], 1
    %9 = vsyncpa %s8, 0
    %10 = vsyncpa [#allocation8], 0
    loop: start=0, step=1, limit=6
    $region2: #{tpu_custom_call.1} parent=1 // loop_pre_header
      _
    $region3: #{tpu_custom_call.1} parent=1 // loop_header
      %s12 = sphi 0, %s16
      %p13 = scmp.ge.s32.totalorder %s12, 6
      %s19 = sphi 0, %s31
      %s20 = sphi 0, %s27
      %s21 = sphi 0, %s19
      %s22 = sphi 0, %s20
      %s23 = sphi 0, %s21
      %s24 = sphi 0, %s22
      %s34 = sphi 0, %s36
      %s37 = sphi 0, %s34
      %s38 = sphi 0, %s37
      %s54 = sphi 0, %s38
      %s58 = sphi 0, %s58
      %s60 = sphi 0, %s58
      %s61 = sphi 0, %s60
      %s75 = sphi 0, %s61
      %s81 = sphi 0, %s83
      %s84 = sphi 0, %s81
      %s85 = sphi 0, %s84
      %s101 = sphi 0, %s85
    $region4: #{tpu_custom_call.1} parent=1 // loop_header_branch
      %15 = sbr.rel (%p13) target = $region8
    $region5: #{tpu_custom_call.1} parent=1 // loop_body
      %s17 = ssub.s32 %s12, 1
      %s18 = ssub.s32 %s12, 2
      %s25 = sadd.s32 1, %s20
      %p26 = scmp.ge.s32.totalorder %s25, 2
      %s27 = scalar_select %p26, 0, %s25
      %s28 = sadd.s32 1, %s19
      %s29 = scalar_select %p26, %s28, %s19
      %p30 = scmp.ge.s32.totalorder %s29, 2
      %s31 = scalar_select %p30, 0, %s29
      %s32 = ssub.s32 %s19, %s31
      %p33 = scmp.eq.s32.totalorder %s32, 0
      %s35 = sadd.s32 %s34, 1
      %s36 = scalar_select %p33, %s34, %s35
      %p39 = pneg %p33
      %p40 = scmp.eq.s32.totalorder %s12, 3
      %p41 = por %p39, %p40
      %p42 = scmp.ne.s32.totalorder %s34, %s37
      %p43 = scmp.eq.s32.totalorder %s12, 0
      %p44 = por %p42, %p43
      %p45 = scmp.ne.s32.totalorder %s34, %s37
      %p46 = scmp.eq.s32.totalorder %s17, 3
      %p47 = por %p45, %p46
      %p48 = scmp.ne.s32.totalorder %s37, %s38
      %p49 = scmp.eq.s32.totalorder %s17, 0
      %p50 = por %p48, %p49
      %p51 = scmp.ne.s32.totalorder %s37, %s38
      %p52 = scmp.eq.s32.totalorder %s18, 3
      %p53 = por %p51, %p52
      %p55 = scmp.ne.s32.totalorder %s38, %s54
      %p56 = scmp.eq.s32.totalorder %s18, 0
      %p57 = por %p55, %p56
      %s59 = sadd.s32 %s58, 1
      %p62 = scmp.eq.s32.totalorder %s12, 3
      %p63 = scmp.ne.s32.totalorder %s58, %s60
      %p64 = scmp.eq.s32.totalorder %s12, 0
      %p65 = por %p63, %p64
      %p66 = scmp.ne.s32.totalorder %s58, %s60
      %p67 = scmp.eq.s32.totalorder %s17, 3
      %p68 = por %p66, %p67
      %p69 = scmp.ne.s32.totalorder %s60, %s61
      %p70 = scmp.eq.s32.totalorder %s17, 0
      %p71 = por %p69, %p70
      %p72 = scmp.ne.s32.totalorder %s60, %s61
      %p73 = scmp.eq.s32.totalorder %s18, 3
      %p74 = por %p72, %p73
      %p76 = scmp.ne.s32.totalorder %s61, %s75
      %p77 = scmp.eq.s32.totalorder %s18, 0
      %p78 = por %p76, %p77
      %s79 = ssub.s32 %s19, %s31
      %p80 = scmp.eq.s32.totalorder %s79, 0
      %s82 = sadd.s32 %s81, 1
      %s83 = scalar_select %p80, %s81, %s82
      %p86 = pneg %p80
      %p87 = scmp.eq.s32.totalorder %s12, 3
      %p88 = por %p86, %p87
      %p89 = scmp.ne.s32.totalorder %s81, %s84
      %p90 = scmp.eq.s32.totalorder %s12, 0
      %p91 = por %p89, %p90
      %p92 = scmp.ne.s32.totalorder %s81, %s84
      %p93 = scmp.eq.s32.totalorder %s17, 3
      %p94 = por %p92, %p93
      %p95 = scmp.ne.s32.totalorder %s84, %s85
      %p96 = scmp.eq.s32.totalorder %s17, 0
      %p97 = por %p95, %p96
      %p98 = scmp.ne.s32.totalorder %s84, %s85
      %p99 = scmp.eq.s32.totalorder %s18, 3
      %p100 = por %p98, %p99
      %p102 = scmp.ne.s32.totalorder %s85, %s101
      %p103 = scmp.eq.s32.totalorder %s18, 0
      %p104 = por %p102, %p103
      %p105 = scmp.le.s32.totalorder 1, %s12
      %p106 = scmp.lt.s32.totalorder %s12, 5
      %p107 = pnand %p105, %p106
      %p108 = pneg %p107
      // Predicated region
      $region9: #{tpu_custom_call.1} parent=5 // pred_check
        _
      $region10: #{tpu_custom_call.1} parent=5 // pred_check_branch
        %110 = sbr.rel (%p107) target = $region12
      $region11: #{tpu_custom_call.1} parent=5 // pred_region
        %s111 = ssub.s32 %s12, 1
        // Predicated region
        $region13: #{tpu_custom_call.1} parent=11 // pred_check
          %p112 = pneg %p71
        $region14: #{tpu_custom_call.1} parent=11 // pred_check_branch
          %114 = sbr.rel (%p112) target = $region16
        $region15: #{tpu_custom_call.1} parent=11 // pred_region
          %s116 = ssub.s32 256, 256
          %117 = vsyncadd [#allocation8], %s116
          %s118 = sshll.u32 [#allocation7], 4
          %s119 = int_to_ptr.vmem [resolvable:$true] %s118
          %124 = dma.hbm_to_vmem [thread:$0]  %s1, 256, %s119, [#allocation8], 128, 128, 8
        $region16: #{tpu_custom_call.1} parent=11 // pred_fallthru
          _
      $region12: #{tpu_custom_call.1} parent=5 // pred_fallthru
        _
      %p125 = scmp.lt.s32.totalorder %s12, 4
      // Predicated region
      $region17: #{tpu_custom_call.1} parent=5 // pred_check
        %p126 = pneg %p125
      $region18: #{tpu_custom_call.1} parent=5 // pred_check_branch
        %128 = sbr.rel (%p126) target = $region20
      $region19: #{tpu_custom_call.1} parent=5 // pred_region
        // Predicated region
        $region21: #{tpu_custom_call.1} parent=19 // pred_check
          %p129 = pneg %p44
        $region22: #{tpu_custom_call.1} parent=19 // pred_check_branch
          %131 = sbr.rel (%p129) target = $region24
        $region23: #{tpu_custom_call.1} parent=19 // pred_region
          %s132 = sand.u32 %s34, 1
          %s133 = scalar_lea.sflag [#allocation6], %s132
          %s134 = sand.u32 %s34, 1
          %s135 = smul.addr %s134, 8
          %s136 = scalar_lea.vmem [#allocation5], %s135
          %s138 = ssub.s32 128, 128
          %139 = vsyncadd %s133, %s138
          %s140 = smul.addr %s19, 128
          %s141 = scalar_lea.hbm %s0, %s140
          %s143 = sshll.u32 %s136, 4
          %s144 = int_to_ptr.vmem [resolvable:$true] %s143
          %146 = dma.hbm_to_vmem [thread:$0]  %s141, 128, %s144, %s133
        $region24: #{tpu_custom_call.1} parent=19 // pred_fallthru
          _
      $region20: #{tpu_custom_call.1} parent=5 // pred_fallthru
        _
      %p147 = scmp.le.s32.totalorder 1, %s12
      %p148 = scmp.lt.s32.totalorder %s12, 5
      %p149 = pnand %p147, %p148
      %p150 = pneg %p149
      // Predicated region
      $region25: #{tpu_custom_call.1} parent=5 // pred_check
        _
      $region26: #{tpu_custom_call.1} parent=5 // pred_check_branch
        %152 = sbr.rel (%p149) target = $region28
      $region27: #{tpu_custom_call.1} parent=5 // pred_region
        %s153 = ssub.s32 %s12, 1
        %s154 = sand.u32 %s37, 1
        %s155 = scalar_lea.sflag [#allocation6], %s154
        %s156 = sand.u32 %s37, 1
        %s157 = smul.addr %s156, 8
        %s158 = scalar_lea.vmem [#allocation5], %s157
        // Predicated region
        $region29: #{tpu_custom_call.1} parent=27 // pred_check
          %p159 = pneg %p50
        $region30: #{tpu_custom_call.1} parent=27 // pred_check_branch
          %161 = sbr.rel (%p159) target = $region32
        $region31: #{tpu_custom_call.1} parent=27 // pred_region
          %162 = dma.done %s155, 128
        $region32: #{tpu_custom_call.1} parent=27 // pred_fallthru
          _
        // Predicated region
        $region33: #{tpu_custom_call.1} parent=27 // pred_check
          %p163 = pneg %p71
        $region34: #{tpu_custom_call.1} parent=27 // pred_check_branch
          %165 = sbr.rel (%p163) target = $region36
        $region35: #{tpu_custom_call.1} parent=27 // pred_region
          %166 = dma.done [#allocation8], 256
        $region36: #{tpu_custom_call.1} parent=27 // pred_fallthru
          _
        %s167 = sand.u32 %s37, 1
        %s168 = scalar_lea.sflag [#allocation6], %s167
        %s169 = sand.u32 %s37, 1
        %s170 = smul.addr %s169, 8
        %s171 = scalar_lea.vmem [#allocation5], %s170
        %p172 = pneg %p50
        %p173 = pneg %p47
        %p174 = pneg %p71
        %p175 = pneg %p68
        %p176 = pneg %p97
        %p177 = pneg %p94
        %p178 = scmp.lt.s32.totalorder %s21, 1
        %s179 = scalar_select %p178, %s21, 1
        %s180 = smul.addr %s179, 8
        %s181 = scalar_lea.vmem %s2, %s180
        %p182 = scmp.lt.s32.totalorder %s21, 1
        %s183 = scalar_select %p182, %s21, 1
        %s184 = smul.addr %s183, 8
        %s185 = scalar_lea.vmem %s2, %s184
        %p186 = scmp.eq.s32.totalorder %s22, 0
        // Predicated region
        $region37: #{tpu_custom_call.1} parent=27 // pred_check
          %p187 = pneg %p186
        $region38: #{tpu_custom_call.1} parent=27 // pred_check_branch
          %189 = sbr.rel (%p187) target = $region40
        $region39: #{tpu_custom_call.1} parent=27 // pred_region
          %vm190 = vcmask 7168
          %191 = vst.msk [vmem:[#allocation2] sm:$0xff] %vm190, -1e+30
          %192 = vst.msk [vmem:[#allocation3] sm:$0xff] %vm190, 0.0
          %193 = vst.msk [vmem:[#allocation4] sm:$0xff] %vm190, 0.0
        $region40: #{tpu_custom_call.1} parent=27 // pred_fallthru
          _
        %s194 = smul.u32 %s21, 8
        %s195 = smul.u32 %s22, 8
        %s196 = scalar_lea.vmem [#allocation7], %s195
        %v197 = vld [vmem:[%s196] sm:$0xff]
        %v198 = vld [vmem:[%s158] sm:$0xff]
        %vm199 = vcmask 261120
        %v201 = vsel %vm199, %v198, 0
        %v204 = vsel %vm199, %v197, 0
        %206 = vmatprep.subr.mxu0 0.0
        %207 = vmatpush1.xpose.msra.mxu0 %v204
        %208 = vmatprep.subr.mxu0 0.0
        %209 = vmatpush1.xpose.msra.mxu0 0.0
        %210 = vmatprep.subr.mxu0 0.0
        %211 = vmatpush1.xpose.msra.mxu0 0.0
        %212 = vmatprep.subr.mxu0 0.0
        %213 = vmatpush1.xpose.msra.mxu0 0.0
        %214 = vmatprep.subr.mxu0 0.0
        %215 = vmatpush1.xpose.msra.mxu0 0.0
        %216 = vmatprep.subr.mxu0 0.0
        %217 = vmatpush1.xpose.msra.mxu0 0.0
        %218 = vmatprep.subr.mxu0 0.0
        %219 = vmatpush1.xpose.msra.mxu0 0.0
        %220 = vmatprep.subr.mxu0 0.0
        %221 = vmatpush1.xpose.msra.mxu0 0.0
        %222 = vmatprep.subr.mxu0 0.0
        %223 = vmatpush1.xpose.msra.mxu0 0.0
        %224 = vmatprep.subr.mxu0 0.0
        %225 = vmatpush1.xpose.msra.mxu0 0.0
        %226 = vmatprep.subr.mxu0 0.0
        %227 = vmatpush1.xpose.msra.mxu0 0.0
        %228 = vmatprep.subr.mxu0 0.0
        %229 = vmatpush1.xpose.msra.mxu0 0.0
        %230 = vmatprep.subr.mxu0 0.0
        %231 = vmatpush1.xpose.msra.mxu0 0.0
        %232 = vmatprep.subr.mxu0 0.0
        %233 = vmatpush1.xpose.msra.mxu0 0.0
        %234 = vmatprep.subr.mxu0 0.0
        %235 = vmatpush1.xpose.msra.mxu0 0.0
        %236 = vmatprep.subr.mxu0 0.0
        %237 = vmatpush1.xpose.msra.mxu0 0.0
        %238 = vmatprep.subr.mxu0 0.0
        %239 = vmatpush1.xpose.msra.mxu0 0.0
        %240 = vmatprep.subr.mxu0 0.0
        %241 = vmatpush1.xpose.msra.mxu0 0.0
        %242 = vmatprep.subr.mxu0 0.0
        %243 = vmatpush1.xpose.msra.mxu0 0.0
        %244 = vmatprep.subr.mxu0 0.0
        %245 = vmatpush1.xpose.msra.mxu0 0.0
        %246 = vmatprep.subr.mxu0 0.0
        %247 = vmatpush1.xpose.msra.mxu0 0.0
        %248 = vmatprep.subr.mxu0 0.0
        %249 = vmatpush1.xpose.msra.mxu0 0.0
        %250 = vmatprep.subr.mxu0 0.0
        %251 = vmatpush1.xpose.msra.mxu0 0.0
        %252 = vmatprep.subr.mxu0 0.0
        %253 = vmatpush1.xpose.msra.mxu0 0.0
        %254 = vmatprep.subr.mxu0 0.0
        %255 = vmatpush1.xpose.msra.mxu0 0.0
        %256 = vmatprep.subr.mxu0 0.0
        %257 = vmatpush1.xpose.msra.mxu0 0.0
        %258 = vmatprep.subr.mxu0 0.0
        %259 = vmatpush1.xpose.msra.mxu0 0.0
        %260 = vmatprep.subr.mxu0 0.0
        %261 = vmatpush1.xpose.msra.mxu0 0.0
        %262 = vmatprep.subr.mxu0 0.0
        %263 = vmatpush1.xpose.msra.mxu0 0.0
        %264 = vmatprep.subr.mxu0 0.0
        %265 = vmatpush1.xpose.msra.mxu0 0.0
        %266 = vmatprep.subr.mxu0 0.0
        %267 = vmatpush1.xpose.msra.mxu0 0.0
        %268 = vmatprep.subr.mxu0 0.0
        %269 = vmatpush1.xpose.msra.mxu0 0.0
        %270 = vmatprep.mubr.f32.mxu0 0.0
        %271 = vmatmul.mubr.f32.gmra.mrb[0].mxu0 %v201
        %v272 = vpop.f32.mrb[0].mxu0
        %v273 = vadd.f32 0.0, %v272
        %v274 = vpop.f32.mrb[0].mxu0
        %275 = vdwg.mxu0
        %p276 = scmp.eq.s32.totalorder %s21, %s22
        // Predicated region
        $region41: #{tpu_custom_call.1} parent=27 // pred_check
          %p277 = pneg %p276
        $region42: #{tpu_custom_call.1} parent=27 // pred_check_branch
          %279 = sbr.rel (%p277) target = $region44
        $region43: #{tpu_custom_call.1} parent=27 // pred_region
          %v280 = vlaneseq
          %v281 = vshrl.u32 %v280, 7
          %v282 = vstv %s194
          %v283 = vadd.s32 %v282, %v281
          %v284 = vlaneseq
          %v285 = vand.u32 %v284, 127
          %v286 = vstv %s195
          %v287 = vadd.s32 %v286, %v285
          %vm288 = vcmp.ne.s32.totalorder %v283, %v287
          %v289 = vsel %vm288, %v273, -1e+30
          %v290 = vld [vmem:[#allocation2] sm:$0xff]
          %vm291 = vcmask 64512
          %v292 = vsel %vm291, %v289, -inf
          %293 = vmax.xlane.f32.xlu0 %v292
          %v294 = vpop.xlane.xlu0 %293
          %v295 = vmax.f32 %v290, %v294
          %v296 = vsub.f32 %v290, %v295
          %v297 = vmul.f32 %v296, 1.442695
          %v298 = vpow.pop %v297
          %v299 = vld [vmem:[#allocation3] sm:$0xff]
          %v300 = vmul.f32 %v298, %v299
          %302 = vset.pattern.permute.xlu0 0
          %303 = vperm.xlu0 %302, %v295
          %v304 = vpop.permute.xlu0 %303
          %v306 = vsub.f32 %v289, %v304
          %v307 = vmul.f32 %v306, 1.442695
          %v308 = vpow.pop %v307
          %v309 = vsel %vm291, %v308, 0.0
          %310 = vadd.xlane.f32.xlu0 %v309
          %v311 = vpop.xlane.xlu0 %310
          %v312 = vadd.f32 %v300, %v311
          %vm313 = vcmask 7168
          %314 = vst.msk [vmem:[#allocation3] sm:$0xff] %vm313, %v312
          %315 = vst.msk [vmem:[#allocation2] sm:$0xff] %vm313, %v295
        $region44: #{tpu_custom_call.1} parent=27 // pred_fallthru
          _
        %p316 = scmp.ne.s32.totalorder %s21, %s22
        // Predicated region
        $region45: #{tpu_custom_call.1} parent=27 // pred_check
          %p317 = pneg %p316
        $region46: #{tpu_custom_call.1} parent=27 // pred_check_branch
          %319 = sbr.rel (%p317) target = $region48
        $region47: #{tpu_custom_call.1} parent=27 // pred_region
          %v320 = vld [vmem:[#allocation2] sm:$0xff]
          %vm321 = vcmask 64512
          %v322 = vsel %vm321, %v273, -inf
          %323 = vmax.xlane.f32.xlu0 %v322
          %v324 = vpop.xlane.xlu0 %323
          %v325 = vmax.f32 %v320, %v324
          %v326 = vsub.f32 %v320, %v325
          %v327 = vmul.f32 %v326, 1.442695
          %v328 = vpow.pop %v327
          %v329 = vld [vmem:[#allocation3] sm:$0xff]
          %v330 = vmul.f32 %v328, %v329
          %332 = vset.pattern.permute.xlu0 0
          %333 = vperm.xlu0 %332, %v325
          %v334 = vpop.permute.xlu0 %333
          %v336 = vsub.f32 %v273, %v334
          %v337 = vmul.f32 %v336, 1.442695
          %v338 = vpow.pop %v337
          %v339 = vsel %vm321, %v338, 0.0
          %340 = vadd.xlane.f32.xlu0 %v339
          %v341 = vpop.xlane.xlu0 %340
          %v342 = vadd.f32 %v330, %v341
          %vm343 = vcmask 7168
          %344 = vst.msk [vmem:[#allocation3] sm:$0xff] %vm343, %v342
          %345 = vst.msk [vmem:[#allocation2] sm:$0xff] %vm343, %v325
        $region48: #{tpu_custom_call.1} parent=27 // pred_fallthru
          _
        %s346 = sadd.s32 %s195, 8
        %s347 = sadd.s32 %s194, 8
        %p348 = scmp.lt.s32.totalorder %s347, 8
        %s349 = scalar_select %p348, %s347, 8
        %s350 = sadd.s32 %s349, 8
        %p351 = scmp.lt.s32.totalorder %s347, %s350
        %p352 = scmp.lt.s32.totalorder %s347, %s346
        %p353 = pnand %p351, %p352
        %p354 = pneg %p353
        %p355 = scmp.lt.s32.totalorder %s195, %s350
        %p356 = pnand %p354, %p355
        %p357 = pneg %p356
        %p358 = scmp.gt.s32.totalorder %s194, 8
        %s359 = scalar_select %p358, %s194, 8
        %s360 = ssub.s32 %s359, 8
        %p361 = scmp.lt.s32.totalorder %s347, 16
        %s362 = scalar_select %p361, %s347, 16
        %s363 = ssub.s32 %s362, 8
        %p364 = scmp.lt.s32.totalorder %s360, %s363
        %p365 = scmp.lt.s32.totalorder %s360, %s346
        %p366 = pnand %p364, %p365
        %p367 = pneg %p366
        %p368 = scmp.lt.s32.totalorder %s195, %s363
        %p369 = pnand %p367, %p368
        %p370 = pneg %p369
        %p371 = por %p357, %p370
        // Predicated region
        $region49: #{tpu_custom_call.1} parent=27 // pred_check
          %p372 = pneg %p371
        $region50: #{tpu_custom_call.1} parent=27 // pred_check_branch
          %374 = sbr.rel (%p372) target = $region52
        $region51: #{tpu_custom_call.1} parent=27 // pred_region
          %v375 = vlaneseq
          %v376 = vshrl.u32 %v375, 7
          %v377 = vstv %s194
          %v378 = vadd.s32 %v377, %v376
          %v379 = vlaneseq
          %v380 = vand.u32 %v379, 127
          %v381 = vstv %s195
          %v382 = vadd.s32 %v381, %v380
          %vm383 = vcmp.lt.s32.totalorder %v378, 8
          %v384 = vadd.s32 %v378, 8
          %v385 = vsub.s32 %v378, 8
          %v386 = vsel %vm383, %v384, %v385
          %v387 = vld [vmem:[#allocation4] sm:$0xff]
          %vm388 = vcmp.eq.s32.totalorder %v382, %v386
          %v389 = vsel %vm388, %v273, 0.0
          %vm390 = vcmask 64512
          %v391 = vsel %vm390, %v389, 0.0
          %392 = vadd.xlane.f32.xlu0 %v391
          %v393 = vpop.xlane.xlu0 %392
          %v394 = vadd.f32 %v387, %v393
          %vm395 = vcmask 7168
          %396 = vst.msk [vmem:[#allocation4] sm:$0xff] %vm395, %v394
        $region52: #{tpu_custom_call.1} parent=27 // pred_fallthru
          _
        %p397 = scmp.eq.s32.totalorder %s22, 1
        // Predicated region
        $region53: #{tpu_custom_call.1} parent=27 // pred_check
          %p398 = pneg %p397
        $region54: #{tpu_custom_call.1} parent=27 // pred_check_branch
          %400 = sbr.rel (%p398) target = $region56
        $region55: #{tpu_custom_call.1} parent=27 // pred_region
          %v401 = vld [vmem:[#allocation2] sm:$0xff]
          %v402 = vld [vmem:[#allocation3] sm:$0xff]
          %v403 = vlog2.pop %v402
          %v404 = vmul.f32 %v403, 0.6931472
          %v405 = vadd.f32 %v401, %v404
          %v406 = vld [vmem:[#allocation4] sm:$0xff]
          %v407 = vsub.f32 %v405, %v406
          %vm408 = vcmask 7168
          %409 = vst.msk [vmem:[%s185] sm:$0xff] %vm408, %v407
        $region56: #{tpu_custom_call.1} parent=27 // pred_fallthru
          _
        %p410 = scmp.lt.s32.totalorder %s21, 1
        %s411 = scalar_select %p410, %s21, 1
        %s412 = smul.addr %s411, 8
        %s413 = scalar_lea.vmem %s2, %s412
        // Predicated region
        $region57: #{tpu_custom_call.1} parent=27 // pred_check
          %p414 = pneg %p94
        $region58: #{tpu_custom_call.1} parent=27 // pred_check_branch
          %416 = sbr.rel (%p414) target = $region60
        $region59: #{tpu_custom_call.1} parent=27 // pred_region
          _
        $region60: #{tpu_custom_call.1} parent=27 // pred_fallthru
          _
      $region28: #{tpu_custom_call.1} parent=5 // pred_fallthru
        _
      %p417 = scmp.le.s32.totalorder 2, %s12
      // Predicated region
      $region61: #{tpu_custom_call.1} parent=5 // pred_check
        %p418 = pneg %p417
      $region62: #{tpu_custom_call.1} parent=5 // pred_check_branch
        %420 = sbr.rel (%p418) target = $region64
      $region63: #{tpu_custom_call.1} parent=5 // pred_region
        %s421 = ssub.s32 %s12, 2
        // Predicated region
        $region65: #{tpu_custom_call.1} parent=63 // pred_check
          %p422 = pneg %p100
        $region66: #{tpu_custom_call.1} parent=63 // pred_check_branch
          %424 = sbr.rel (%p422) target = $region68
        $region67: #{tpu_custom_call.1} parent=63 // pred_region
          %p425 = scmp.lt.s32.totalorder %s23, 1
          %s426 = scalar_select %p425, %s23, 1
          %s427 = smul.addr %s426, 8
          %s428 = scalar_lea.vmem %s2, %s427
        $region68: #{tpu_custom_call.1} parent=63 // pred_fallthru
          _
      $region64: #{tpu_custom_call.1} parent=5 // pred_fallthru
        _
    $region6: #{tpu_custom_call.1} parent=1 // loop_footer
      %s16 = sadd.s32 1, %s12
    $region7: #{tpu_custom_call.1} parent=1 // loop_footer_branch
      %11 = sbr.rel target = $region3
    $region8: #{tpu_custom_call.1} parent=1 // loop_exit
      _
    %429 = vsyncpa [#allocation6], 1
    %s430 = scalar_lea.sflag [#allocation6], 1
    %431 = vsyncpa %s430, 1
    %432 = vsyncpa [#allocation8], 1

</llo_original>
